<compile_context>
chip_gen: v7x
topology: tpu7x:2x2x1
jax: 0.10.0
libtpu: 0.0.40
codegen_flags: <defaults>
</compile_context>

<pallas_src>
import functools

import jax
import jax.numpy as jnp
import numpy as np
from jax.experimental import pallas as pl
from jax.experimental.pallas import tpu as pltpu


# ----------------------------------------------------------------------------
# Kernel 1: SwitchGate, pass 1 (token-tiled)
#   masked[t, e] = softmax(x @ Wg + bg)[t, e] * top1_mask[t, e]
#   denom[0, e]  = eps + sum_t masked[t, e]        (accumulated across token tiles)
# The final  masked / denom * capacity  is fused into the MoE kernel.
# ----------------------------------------------------------------------------
def gate_kernel(x_ref, wg_ref, bg_ref, masked_ref, denom_ref, *,
                epsilon, n_tokens, tile_n):
    ti = pl.program_id(0)

    @pl.when(ti == 0)
    def _():
        denom_ref[...] = jnp.full_like(denom_ref, epsilon)

    x = x_ref[...].astype(jnp.float32)   # gate stays f32 so routing matches reference
    logits = jnp.dot(x, wg_ref[...], preferred_element_type=jnp.float32) + bg_ref[...]

    # softmax over experts (last axis)
    m = jnp.max(logits, axis=-1, keepdims=True)
    ex = jnp.exp(logits - m)
    gs = ex / jnp.sum(ex, axis=-1, keepdims=True)

    # top-1 one-hot mask (first occurrence on ties, matching torch.topk/argmax)
    num_e = gs.shape[-1]
    col = jax.lax.broadcasted_iota(jnp.int32, gs.shape, 1)
    top = jnp.max(gs, axis=-1, keepdims=True)
    is_max = gs >= top
    first_idx = jnp.min(jnp.where(is_max, col, num_e), axis=-1, keepdims=True)
    mask = (col == first_idx).astype(jnp.float32)
    masked = gs * mask

    # Zero padded rows so they don't perturb the per-expert denominators.
    row = jax.lax.broadcasted_iota(jnp.int32, masked.shape, 0) + ti * tile_n
    masked = jnp.where(row < n_tokens, masked, 0.0)

    masked_ref[...] = masked
    denom_ref[...] += jnp.sum(masked, axis=0, keepdims=True)


# ----------------------------------------------------------------------------
# Kernel 2: experts + gate normalization + weighted combine
#   grid = (token_tiles, experts); output block is resident across the expert
#   axis and accumulated in place (no scratch).
#   y_e = GELU(x @ W1_e + b1_e) @ W2_e + b2_e          (bf16 in, f32 accum)
#   g_e = masked[:, e] / denom[e] * capacity           (NaN -> 0, as in torch)
#   out += g_e * y_e
# ----------------------------------------------------------------------------
def moe_kernel(x_ref, gs_ref, denom_ref, w1_ref, b1_ref, w2_ref, b2_ref, o_ref, *,
               capacity):
    e = pl.program_id(1)

    @pl.when(e == 0)
    def _():
        o_ref[...] = jnp.zeros_like(o_ref)

    # Expert FFN: bf16 weight streaming, f32 accumulation on the MXU.
    x = x_ref[...].astype(jnp.bfloat16)
    h = jnp.dot(x, w1_ref[0], preferred_element_type=jnp.float32) + b1_ref[0]
    h = jax.nn.gelu(h, approximate=False)          # torch nn.GELU default = exact erf
    y = jnp.dot(h.astype(jnp.bfloat16), w2_ref[0],
                preferred_element_type=jnp.float32) + b2_ref[0]
    y = jnp.where(jnp.isnan(y), 0.0, y)            # mirrors NaN scrub on expert outputs

    # Extract this expert's gate column (E is tiny: one vreg of VPU/XLU work)
    # and finish the Switch normalization on the [tile_n, 1] column only.
    gs = gs_ref[...]
    col = jax.lax.broadcasted_iota(jnp.int32, gs.shape, 1)
    g_masked = jnp.sum(jnp.where(col == e, gs, 0.0), axis=-1, keepdims=True)   # [tn, 1]
    dn = denom_ref[...]
    d = jnp.sum(jnp.where(col[:1] == e, dn, 0.0), axis=-1, keepdims=True)      # [1, 1]
    g = g_masked * (capacity / d)
    g = jnp.where(jnp.isnan(g), 0.0, g)            # mirrors NaN scrub on gate scores

    o_ref[...] += g * y


# ----------------------------------------------------------------------------
# Wrapper
# ----------------------------------------------------------------------------
def _vmem_limit_bytes(tile_n, dim, hidden, num_e):
    # double-buffered bf16 expert weights + biases + resident activation tiles,
    # with generous headroom; clamped to sane bounds across v5e/v6e/v7x.
    weights = 2 * 2 * (dim * hidden + hidden * dim) * 2
    biases = 2 * 2 * (hidden + dim) * 4
    acts = 2 * (2 * tile_n * dim * 4 + tile_n * num_e * 4 + num_e * 4)
    est = weights + biases + acts
    return int(min(48 << 20, max(2 * est + (8 << 20), 16 << 20)))


def switch_moe_forward(x, params, *, capacity_factor=1.0, epsilon=1e-6, tile_n=128):
    n, dim = x.shape
    num_e = params["w_gate"].shape[1]
    hidden = params["w1"].shape[2]
    capacity = float(int(capacity_factor * n))

    num_tiles = -(-n // tile_n)
    n_pad = num_tiles * tile_n
    x_p = x if n_pad == n else jnp.pad(x, ((0, n_pad - n), (0, 0)))

    # --- gate pass 1: masked top-1 scores + per-expert denominators ------------
    masked, denom = pl.pallas_call(
        functools.partial(gate_kernel, epsilon=epsilon, n_tokens=n, tile_n=tile_n),
        out_shape=(jax.ShapeDtypeStruct((n_pad, num_e), jnp.float32),
                   jax.ShapeDtypeStruct((1, num_e), jnp.float32)),
        grid=(num_tiles,),
        in_specs=[
            pl.BlockSpec((tile_n, dim), lambda ti: (ti, 0)),
            pl.BlockSpec((dim, num_e), lambda ti: (0, 0)),
            pl.BlockSpec((1, num_e), lambda ti: (0, 0)),
        ],
        out_specs=(
            pl.BlockSpec((tile_n, num_e), lambda ti: (ti, 0)),
            pl.BlockSpec((1, num_e), lambda ti: (0, 0)),   # resident accumulator
        ),
        compiler_params=pltpu.CompilerParams(dimension_semantics=("arbitrary",)),
    )(x_p, params["w_gate"], params["b_gate"])

    # --- experts + combine ------------------------------------------------------
    w1 = params["w1"].astype(jnp.bfloat16)
    w2 = params["w2"].astype(jnp.bfloat16)

    cost = pl.CostEstimate(
        flops=int(4 * num_e * n_pad * dim * hidden + 2 * n_pad * dim * num_e),
        transcendentals=int(num_e * n_pad * hidden),
        bytes_accessed=int(num_tiles * num_e * 2 * dim * hidden * 2
                           + num_e * (hidden + dim) * 4
                           + n_pad * dim * 4 * 2
                           + n_pad * num_e * 4 + num_e * 4),
    )

    moe_out = pl.pallas_call(
        functools.partial(moe_kernel, capacity=capacity),
        out_shape=jax.ShapeDtypeStruct((n_pad, dim), jnp.float32),
        grid=(num_tiles, num_e),
        in_specs=[
            pl.BlockSpec((tile_n, dim), lambda ti, ei: (ti, 0)),        # x tile
            pl.BlockSpec((tile_n, num_e), lambda ti, ei: (ti, 0)),      # masked gate tile
            pl.BlockSpec((1, num_e), lambda ti, ei: (0, 0)),            # denominators
            pl.BlockSpec((1, dim, hidden), lambda ti, ei: (ei, 0, 0)),  # W1_e (bf16)
            pl.BlockSpec((1, 1, hidden), lambda ti, ei: (ei, 0, 0)),    # b1_e
            pl.BlockSpec((1, hidden, dim), lambda ti, ei: (ei, 0, 0)),  # W2_e (bf16)
            pl.BlockSpec((1, 1, dim), lambda ti, ei: (ei, 0, 0)),       # b2_e
        ],
        out_specs=pl.BlockSpec((tile_n, dim), lambda ti, ei: (ti, 0)),  # resident acc
        compiler_params=pltpu.CompilerParams(
            dimension_semantics=("parallel", "arbitrary"),
            vmem_limit_bytes=_vmem_limit_bytes(tile_n, dim, hidden, num_e),
        ),
        cost_estimate=cost,
    )(x_p, masked, denom, w1, params["b1"], w2, params["b2"])

    return moe_out[:n], None


# ----------------------------------------------------------------------------
# Pure-JAX reference mirroring the kernel's bf16 weight streaming / f32 accum
# (gate math fully in f32, same as the kernel).
# ----------------------------------------------------------------------------
def reference_forward(x, params, *, capacity_factor=1.0, epsilon=1e-6):
    n = x.shape[0]
    capacity = float(int(capacity_factor * n))
    logits = x @ params["w_gate"] + params["b_gate"]
    gs = jax.nn.softmax(logits, axis=-1)
    idx = jnp.argmax(gs, axis=-1)
    mask = jax.nn.one_hot(idx, gs.shape[-1], dtype=gs.dtype)
    masked = gs * mask
    denom = masked.sum(0, keepdims=True) + epsilon
    gs = masked / denom * capacity

    x16 = x.astype(jnp.bfloat16)
    outs = []
    for ei in range(params["w1"].shape[0]):
        w1 = params["w1"][ei].astype(jnp.bfloat16)
        w2 = params["w2"][ei].astype(jnp.bfloat16)
        h = jnp.dot(x16, w1, preferred_element_type=jnp.float32) + params["b1"][ei]
        h = jax.nn.gelu(h, approximate=False)
        y = jnp.dot(h.astype(jnp.bfloat16), w2,
                    preferred_element_type=jnp.float32) + params["b2"][ei]
        outs.append(y)
    stacked = jnp.stack(outs, axis=-1)  # [N, dim, E]
    return jnp.sum(gs[:, None, :] * stacked, axis=-1)


# ----------------------------------------------------------------------------
# Deterministic parameter init + run
# ----------------------------------------------------------------------------
def init_params(key, dim, num_experts, mult):
    hidden = dim * mult
    ks = jax.random.split(key, 6)

    def uni(k, shape, fan_in):
        b = 1.0 / np.sqrt(fan_in)
        return jax.random.uniform(k, shape, jnp.float32, -b, b)

    return {
        "w_gate": uni(ks[0], (dim, num_experts), dim),
        "b_gate": uni(ks[1], (1, num_experts), dim),
        "w1": uni(ks[2], (num_experts, dim, hidden), dim),
        "b1": uni(ks[3], (num_experts, 1, hidden), dim),
        "w2": uni(ks[4], (num_experts, hidden, dim), hidden),
        "b2": uni(ks[5], (num_experts, 1, dim), hidden),
    }


if __name__ == "__main__":
    N, DIM, NUM_EXPERTS, MULT = 256, 128, 4, 4   # hidden = 512; 2 token tiles of 128

    key = jax.random.PRNGKey(0)
    k_x, k_p = jax.random.split(key)
    x = jax.random.normal(k_x, (N, DIM), jnp.float32)
    params = init_params(k_p, DIM, NUM_EXPERTS, MULT)

    out, loss = switch_moe_forward(x, params, tile_n=128)
    out = jax.block_until_ready(out)

    ref = reference_forward(x, params)
    np.testing.assert_allclose(np.asarray(out), np.asarray(ref), rtol=2e-2, atol=2e-2)

    print("KERNEL_OK")
</pallas_src>

<mosaic_0001>
module attributes {stable_mosaic.version = 11 : i64} {
  func.func @gate_kernel(%arg0: i32, %arg1: memref<128x128xf32, #tpu.memory_space<vmem>>, %arg2: memref<128x4xf32, #tpu.memory_space<vmem>>, %arg3: memref<1x4xf32, #tpu.memory_space<vmem>>, %arg4: memref<128x4xf32, #tpu.memory_space<vmem>>, %arg5: memref<1x4xf32, #tpu.memory_space<vmem>>) attributes {dimension_semantics = [#tpu.dimension_semantics<arbitrary>], iteration_bounds = array<i64: 2>, scalar_prefetch = 0 : i64, scratch_operands = 0 : i64, tpu.core_type = #tpu.core_type<tc>, window_params = [{transform_indices = @transform_0, window_bounds = array<i64: 128, 128>}, {pipeline_mode = #tpu.pipeline_mode<synchronous>, transform_indices = @transform_1, window_bounds = array<i64: 128, 4>}, {pipeline_mode = #tpu.pipeline_mode<synchronous>, transform_indices = @transform_2, window_bounds = array<i64: 1, 4>}, {transform_indices = @transform_3, window_bounds = array<i64: 128, 4>}, {pipeline_mode = #tpu.pipeline_mode<synchronous>, transform_indices = @transform_4, window_bounds = array<i64: 1, 4>}]} {
    %c0_i32 = arith.constant 0 : i32
    %0 = arith.cmpi eq, %arg0, %c0_i32 : i32
    %1 = arith.extui %0 : i1 to i32
    %c0_i32_0 = arith.constant 0 : i32
    %2 = arith.cmpi ne, %1, %c0_i32_0 : i32
    scf.if %2 {
      %cst_18 = arith.constant 9.99999997E-7 : f32
      %46 = vector.broadcast %cst_18 : f32 to vector<1x4xf32>
      %c0_19 = arith.constant 0 : index
      %c0_20 = arith.constant 0 : index
      %47 = vector.load %arg5[%c0_19, %c0_20] : memref<1x4xf32, #tpu.memory_space<vmem>>, vector<1x4xf32>
      tpu.vector_store %arg5[%c0_19, %c0_20], %46 {strides = array<i32>} : memref<1x4xf32, #tpu.memory_space<vmem>>, vector<1x4xf32>,
    } else {
    }
    %c0 = arith.constant 0 : index
    %c0_1 = arith.constant 0 : index
    %3 = vector.load %arg1[%c0, %c0_1] : memref<128x128xf32, #tpu.memory_space<vmem>>, vector<128x128xf32>
    %c0_2 = arith.constant 0 : index
    %c0_3 = arith.constant 0 : index
    %4 = vector.load %arg2[%c0_2, %c0_3] : memref<128x4xf32, #tpu.memory_space<vmem>>, vector<128x4xf32>
    %cst = arith.constant dense<0.000000e+00> : vector<128x4xf32>
    %5 = tpu.matmul %3, %4, %cst {dimension_numbers = #tpu.dot_dimension_numbers<[1], [0], [0], [1], [0, 0, 1, 1], [], []>} : vector<128x128xf32>, vector<128x4xf32>, vector<128x4xf32> -> vector<128x4xf32>
    %c0_4 = arith.constant 0 : index
    %c0_5 = arith.constant 0 : index
    %6 = vector.load %arg3[%c0_4, %c0_5] : memref<1x4xf32, #tpu.memory_space<vmem>>, vector<1x4xf32>
    %7 = vector.broadcast %6 : vector<1x4xf32> to vector<128x4xf32>
    %8 = arith.addf %5, %7 : vector<128x4xf32>
    %cst_6 = arith.constant dense<0xFF800000> : vector<128xf32>
    %9 = vector.multi_reduction <maximumf>, %8, %cst_6 [1] : vector<128x4xf32> to vector<128xf32>
    %10 = vector.shape_cast %9 : vector<128xf32> to vector<128x1xf32>
    %11 = vector.broadcast %10 : vector<128x1xf32> to vector<128x4xf32>
    %12 = arith.subf %8, %11 : vector<128x4xf32>
    %13 = math.exp %12 : vector<128x4xf32>
    %cst_7 = arith.constant dense<0.000000e+00> : vector<128xf32>
    %14 = vector.multi_reduction <add>, %13, %cst_7 [1] : vector<128x4xf32> to vector<128xf32>
    %15 = vector.shape_cast %14 : vector<128xf32> to vector<128x1xf32>
    %16 = vector.broadcast %15 : vector<128x1xf32> to vector<128x4xf32>
    %17 = arith.divf %13, %16 : vector<128x4xf32>
    %18 = tpu.iota {dimensions = array<i32: 1>} : vector<128x4xi32>
    %cst_8 = arith.constant dense<0xFF800000> : vector<128xf32>
    %19 = vector.multi_reduction <maximumf>, %17, %cst_8 [1] : vector<128x4xf32> to vector<128xf32>
    %20 = vector.shape_cast %19 : vector<128xf32> to vector<128x1xf32>
    %21 = vector.broadcast %20 : vector<128x1xf32> to vector<128x4xf32>
    %22 = arith.cmpf oge, %17, %21 : vector<128x4xf32>
    %c4_i32 = arith.constant 4 : i32
    %23 = vector.broadcast %c4_i32 : i32 to vector<128x4xi32>
    %24 = arith.select %22, %18, %23 : vector<128x4xi1>, vector<128x4xi32>
    %cst_9 = arith.constant dense<2147483647> : vector<128xi32>
    %25 = vector.multi_reduction <minsi>, %24, %cst_9 [1] : vector<128x4xi32> to vector<128xi32>
    %26 = vector.shape_cast %25 : vector<128xi32> to vector<128x1xi32>
    %27 = vector.broadcast %26 : vector<128x1xi32> to vector<128x4xi32>
    %28 = arith.cmpi eq, %18, %27 : vector<128x4xi32>
    %29 = arith.extui %28 : vector<128x4xi1> to vector<128x4xi32>
    %30 = arith.sitofp %29 : vector<128x4xi32> to vector<128x4xf32>
    %31 = arith.mulf %17, %30 : vector<128x4xf32>
    %32 = tpu.iota {dimensions = array<i32: 0>} : vector<128x4xi32>
    %c128_i32 = arith.constant 128 : i32
    %33 = arith.muli %arg0, %c128_i32 : i32
    %34 = vector.broadcast %33 : i32 to vector<128x4xi32>
    %35 = arith.addi %32, %34 : vector<128x4xi32>
    %c256_i32 = arith.constant 256 : i32
    %36 = vector.broadcast %c256_i32 : i32 to vector<128x4xi32>
    %37 = arith.cmpi slt, %35, %36 : vector<128x4xi32>
    %cst_10 = arith.constant 0.000000e+00 : f32
    %38 = vector.broadcast %cst_10 : f32 to vector<128x4xf32>
    %39 = arith.select %37, %31, %38 : vector<128x4xi1>, vector<128x4xf32>
    %c0_11 = arith.constant 0 : index
    %c0_12 = arith.constant 0 : index
    %40 = vector.load %arg4[%c0_11, %c0_12] : memref<128x4xf32, #tpu.memory_space<vmem>>, vector<128x4xf32>
    tpu.vector_store %arg4[%c0_11, %c0_12], %39 {strides = array<i32>} : memref<128x4xf32, #tpu.memory_space<vmem>>, vector<128x4xf32>,
    %c0_13 = arith.constant 0 : index
    %c0_14 = arith.constant 0 : index
    %41 = vector.load %arg5[%c0_13, %c0_14] : memref<1x4xf32, #tpu.memory_space<vmem>>, vector<1x4xf32>
    %cst_15 = arith.constant dense<0.000000e+00> : vector<4xf32>
    %42 = vector.multi_reduction <add>, %39, %cst_15 [0] : vector<128x4xf32> to vector<4xf32>
    %43 = vector.shape_cast %42 : vector<4xf32> to vector<1x4xf32>
    %44 = arith.addf %41, %43 : vector<1x4xf32>
    %c0_16 = arith.constant 0 : index
    %c0_17 = arith.constant 0 : index
    %45 = vector.load %arg5[%c0_16, %c0_17] : memref<1x4xf32, #tpu.memory_space<vmem>>, vector<1x4xf32>
    tpu.vector_store %arg5[%c0_16, %c0_17], %44 {strides = array<i32>} : memref<1x4xf32, #tpu.memory_space<vmem>>, vector<1x4xf32>,
    return
  }
  func.func @transform_0(%arg0: i32) -> (i32, i32) {
    %c0_i32 = arith.constant 0 : i32
    %c0_i32_0 = arith.constant 0 : i32
    return %arg0, %c0_i32 : i32, i32
  }
  func.func @transform_1(%arg0: i32) -> (i32, i32) {
    %c0_i32 = arith.constant 0 : i32
    %c0_i32_0 = arith.constant 0 : i32
    %c0_i32_1 = arith.constant 0 : i32
    return %c0_i32, %c0_i32_0 : i32, i32
  }
  func.func @transform_2(%arg0: i32) -> (i32, i32) {
    %c0_i32 = arith.constant 0 : i32
    %c0_i32_0 = arith.constant 0 : i32
    %c0_i32_1 = arith.constant 0 : i32
    return %c0_i32, %c0_i32_0 : i32, i32
  }
  func.func @transform_3(%arg0: i32) -> (i32, i32) {
    %c0_i32 = arith.constant 0 : i32
    %c0_i32_0 = arith.constant 0 : i32
    return %arg0, %c0_i32 : i32, i32
  }
  func.func @transform_4(%arg0: i32) -> (i32, i32) {
    %c0_i32 = arith.constant 0 : i32
    %c0_i32_0 = arith.constant 0 : i32
    %c0_i32_1 = arith.constant 0 : i32
    return %c0_i32, %c0_i32_0 : i32, i32
  }
}

</mosaic_0001>

<llo_original>
// kernel: tpu_custom_call.1
$region0: #{tpu_custom_call.1}
  #allocation0 [shape = 'u32[]', space=smem, size = 0x4, offset = 0x4, fixed_abs, tag = 'smem constant byte address 0x4 - core index']
  #allocation1 [shape = 'u32[144,128]{1,0:T(1,128)}', space=vmem, size = 0x12000, scoped, tag = 'internal scratch']
  %s0 = inlined_call_operand.hbm [shape: f32[256,128], index: 0, kind: input, shape index: {}]
  %s1 = inlined_call_operand.vmem [shape: f32[128,4], index: 1, kind: input, shape index: {}]
  %s2 = inlined_call_operand.vmem [shape: f32[1,4], index: 2, kind: input, shape index: {}]
  %s3 = inlined_call_operand.vmem [shape: f32[256,4], index: 3, kind: output, shape index: {0}]
  %s4 = inlined_call_operand.hbm [shape: f32[1,4], index: 4, kind: output, shape index: {1}]
  %5 = xla_tuple %s3, %s4
  %s6 = sld [smem:[#allocation0]]
  $region61: #{tpu_custom_call.1} parent=0
    _
  %s8 = ssub.s32 1, %s6
  %s9 = scalar_select 0, %s8, %s6
  $region1: #{tpu_custom_call.1} parent=0
    #allocation2 [shape = 'u8[131072]{0}', space=vmem, size = 0x20000, scoped, tag = 'input window, operand 0']
    #allocation3 [shape = 's32[2]{0}', space=sflag, size = 0x8, scoped, tag = 'scoped memory for tpu_custom_call.1']
    #allocation4 [shape = 's32[2]{0}', space=sflag, size = 0x8, scoped, tag = 'scoped memory for tpu_custom_call.1']
    #allocation5 [shape = 'u8[512]{0}', space=vmem, size = 0x400, scoped, tag = 'output window, operand 1, single buffered']
    %10 = vsyncpa [#allocation3], 0
    %s11 = scalar_lea.sflag [#allocation3], 1
    %12 = vsyncpa %s11, 0
    %13 = vsyncpa [#allocation4], 0
    loop: start=0, step=1, limit=4
    $region2: #{tpu_custom_call.1} parent=1 // loop_pre_header
      _
    $region3: #{tpu_custom_call.1} parent=1 // loop_header
      %s15 = sphi 0, %s19
      %p16 = scmp.ge.s32.totalorder %s15, 4
      %s25 = sphi 0, %s27
      %s28 = sphi 0, %s25
      %s29 = sphi 0, %s28
      %s45 = sphi 0, %s29
      %s49 = sphi 0, %s49
      %s51 = sphi 0, %s49
      %s52 = sphi 0, %s51
      %s66 = sphi 0, %s52
      %s70 = sphi 0, %s70
      %s72 = sphi 0, %s70
      %s73 = sphi 0, %s72
      %s87 = sphi 0, %s73
      %s93 = sphi 0, %s95
      %s96 = sphi 0, %s93
      %s97 = sphi 0, %s96
      %s113 = sphi 0, %s97
      %s117 = sphi 0, %s117
      %s119 = sphi 0, %s117
      %s120 = sphi 0, %s119
      %s134 = sphi 0, %s120
    $region4: #{tpu_custom_call.1} parent=1 // loop_header_branch
      %18 = sbr.rel (%p16) target = $region8
    $region5: #{tpu_custom_call.1} parent=1 // loop_body
      %s20 = ssub.s32 %s15, 1
      %s21 = ssub.s32 %s15, 2
      %s22 = sadd.s32 %s15, 1
      %s23 = ssub.s32 %s15, %s22
      %p24 = scmp.eq.s32.totalorder %s23, 0
      %s26 = sadd.s32 %s25, 1
      %s27 = scalar_select %p24, %s25, %s26
      %p30 = pneg %p24
      %p31 = scmp.eq.s32.totalorder %s15, 1
      %p32 = por %p30, %p31
      %p33 = scmp.ne.s32.totalorder %s25, %s28
      %p34 = scmp.eq.s32.totalorder %s15, 0
      %p35 = por %p33, %p34
      %p36 = scmp.ne.s32.totalorder %s25, %s28
      %p37 = scmp.eq.s32.totalorder %s20, 1
      %p38 = por %p36, %p37
      %p39 = scmp.ne.s32.totalorder %s28, %s29
      %p40 = scmp.eq.s32.totalorder %s20, 0
      %p41 = por %p39, %p40
      %p42 = scmp.ne.s32.totalorder %s28, %s29
      %p43 = scmp.eq.s32.totalorder %s21, 1
      %p44 = por %p42, %p43
      %p46 = scmp.ne.s32.totalorder %s29, %s45
      %p47 = scmp.eq.s32.totalorder %s21, 0
      %p48 = por %p46, %p47
      %s50 = sadd.s32 %s49, 1
      %p53 = scmp.eq.s32.totalorder %s15, 1
      %p54 = scmp.ne.s32.totalorder %s49, %s51
      %p55 = scmp.eq.s32.totalorder %s15, 0
      %p56 = por %p54, %p55
      %p57 = scmp.ne.s32.totalorder %s49, %s51
      %p58 = scmp.eq.s32.totalorder %s20, 1
      %p59 = por %p57, %p58
      %p60 = scmp.ne.s32.totalorder %s51, %s52
      %p61 = scmp.eq.s32.totalorder %s20, 0
      %p62 = por %p60, %p61
      %p63 = scmp.ne.s32.totalorder %s51, %s52
      %p64 = scmp.eq.s32.totalorder %s21, 1
      %p65 = por %p63, %p64
      %p67 = scmp.ne.s32.totalorder %s52, %s66
      %p68 = scmp.eq.s32.totalorder %s21, 0
      %p69 = por %p67, %p68
      %s71 = sadd.s32 %s70, 1
      %p74 = scmp.eq.s32.totalorder %s15, 1
      %p75 = scmp.ne.s32.totalorder %s70, %s72
      %p76 = scmp.eq.s32.totalorder %s15, 0
      %p77 = por %p75, %p76
      %p78 = scmp.ne.s32.totalorder %s70, %s72
      %p79 = scmp.eq.s32.totalorder %s20, 1
      %p80 = por %p78, %p79
      %p81 = scmp.ne.s32.totalorder %s72, %s73
      %p82 = scmp.eq.s32.totalorder %s20, 0
      %p83 = por %p81, %p82
      %p84 = scmp.ne.s32.totalorder %s72, %s73
      %p85 = scmp.eq.s32.totalorder %s21, 1
      %p86 = por %p84, %p85
      %p88 = scmp.ne.s32.totalorder %s73, %s87
      %p89 = scmp.eq.s32.totalorder %s21, 0
      %p90 = por %p88, %p89
      %s91 = ssub.s32 %s15, %s22
      %p92 = scmp.eq.s32.totalorder %s91, 0
      %s94 = sadd.s32 %s93, 1
      %s95 = scalar_select %p92, %s93, %s94
      %p98 = pneg %p92
      %p99 = scmp.eq.s32.totalorder %s15, 1
      %p100 = por %p98, %p99
      %p101 = scmp.ne.s32.totalorder %s93, %s96
      %p102 = scmp.eq.s32.totalorder %s15, 0
      %p103 = por %p101, %p102
      %p104 = scmp.ne.s32.totalorder %s93, %s96
      %p105 = scmp.eq.s32.totalorder %s20, 1
      %p106 = por %p104, %p105
      %p107 = scmp.ne.s32.totalorder %s96, %s97
      %p108 = scmp.eq.s32.totalorder %s20, 0
      %p109 = por %p107, %p108
      %p110 = scmp.ne.s32.totalorder %s96, %s97
      %p111 = scmp.eq.s32.totalorder %s21, 1
      %p112 = por %p110, %p111
      %p114 = scmp.ne.s32.totalorder %s97, %s113
      %p115 = scmp.eq.s32.totalorder %s21, 0
      %p116 = por %p114, %p115
      %s118 = sadd.s32 %s117, 1
      %p121 = scmp.eq.s32.totalorder %s15, 1
      %p122 = scmp.ne.s32.totalorder %s117, %s119
      %p123 = scmp.eq.s32.totalorder %s15, 0
      %p124 = por %p122, %p123
      %p125 = scmp.ne.s32.totalorder %s117, %s119
      %p126 = scmp.eq.s32.totalorder %s20, 1
      %p127 = por %p125, %p126
      %p128 = scmp.ne.s32.totalorder %s119, %s120
      %p129 = scmp.eq.s32.totalorder %s20, 0
      %p130 = por %p128, %p129
      %p131 = scmp.ne.s32.totalorder %s119, %s120
      %p132 = scmp.eq.s32.totalorder %s21, 1
      %p133 = por %p131, %p132
      %p135 = scmp.ne.s32.totalorder %s120, %s134
      %p136 = scmp.eq.s32.totalorder %s21, 0
      %p137 = por %p135, %p136
      %p138 = scmp.le.s32.totalorder 1, %s15
      %p139 = scmp.lt.s32.totalorder %s15, 3
      %p140 = pnand %p138, %p139
      %p141 = pneg %p140
      // Predicated region
      $region9: #{tpu_custom_call.1} parent=5 // pred_check
        _
      $region10: #{tpu_custom_call.1} parent=5 // pred_check_branch
        %143 = sbr.rel (%p140) target = $region12
      $region11: #{tpu_custom_call.1} parent=5 // pred_region
        %s144 = ssub.s32 %s15, 1
        // Predicated region
        $region13: #{tpu_custom_call.1} parent=11 // pred_check
          %p145 = pneg %p62
        $region14: #{tpu_custom_call.1} parent=11 // pred_check_branch
          %147 = sbr.rel (%p145) target = $region16
        $region15: #{tpu_custom_call.1} parent=11 // pred_region
          _
        $region16: #{tpu_custom_call.1} parent=11 // pred_fallthru
          _
        // Predicated region
        $region17: #{tpu_custom_call.1} parent=11 // pred_check
          %p148 = pneg %p83
        $region18: #{tpu_custom_call.1} parent=11 // pred_check_branch
          %150 = sbr.rel (%p148) target = $region20
        $region19: #{tpu_custom_call.1} parent=11 // pred_region
          _
        $region20: #{tpu_custom_call.1} parent=11 // pred_fallthru
          _
      $region12: #{tpu_custom_call.1} parent=5 // pred_fallthru
        _
      %p151 = scmp.lt.s32.totalorder %s15, 2
      // Predicated region
      $region21: #{tpu_custom_call.1} parent=5 // pred_check
        %p152 = pneg %p151
      $region22: #{tpu_custom_call.1} parent=5 // pred_check_branch
        %154 = sbr.rel (%p152) target = $region24
      $region23: #{tpu_custom_call.1} parent=5 // pred_region
        // Predicated region
        $region25: #{tpu_custom_call.1} parent=23 // pred_check
          %p155 = pneg %p35
        $region26: #{tpu_custom_call.1} parent=23 // pred_check_branch
          %157 = sbr.rel (%p155) target = $region28
        $region27: #{tpu_custom_call.1} parent=23 // pred_region
          %s158 = sand.u32 %s25, 1
          %s159 = scalar_lea.sflag [#allocation3], %s158
          %s160 = sand.u32 %s25, 1
          %s161 = smul.addr %s160, 128
          %s162 = scalar_lea.vmem [#allocation2], %s161
          %s163 = smul.u32 16, %s15
          %s165 = ssub.s32 2048, 2048
          %166 = vsyncadd %s159, %s165
          %s167 = smul.addr %s163, 128
          %s168 = scalar_lea.hbm %s0, %s167
          %s169 = sshll.u32 %s162, 4
          %s170 = int_to_ptr.vmem [resolvable:$true] %s169
          %175 = dma.hbm_to_vmem [thread:$0]  %s168, 2048, %s170, %s159, 128, 128, 8
        $region28: #{tpu_custom_call.1} parent=23 // pred_fallthru
          _
      $region24: #{tpu_custom_call.1} parent=5 // pred_fallthru
        _
      %p176 = scmp.le.s32.totalorder 1, %s15
      %p177 = scmp.lt.s32.totalorder %s15, 3
      %p178 = pnand %p176, %p177
      %p179 = pneg %p178
      // Predicated region
      $region29: #{tpu_custom_call.1} parent=5 // pred_check
        _
      $region30: #{tpu_custom_call.1} parent=5 // pred_check_branch
        %181 = sbr.rel (%p178) target = $region32
      $region31: #{tpu_custom_call.1} parent=5 // pred_region
        %s182 = ssub.s32 %s15, 1
        %s183 = sand.u32 %s28, 1
        %s184 = scalar_lea.sflag [#allocation3], %s183
        %s185 = sand.u32 %s28, 1
        %s186 = smul.addr %s185, 128
        %s187 = scalar_lea.vmem [#allocation2], %s186
        // Predicated region
        $region33: #{tpu_custom_call.1} parent=31 // pred_check
          %p188 = pneg %p41
        $region34: #{tpu_custom_call.1} parent=31 // pred_check_branch
          %190 = sbr.rel (%p188) target = $region36
        $region35: #{tpu_custom_call.1} parent=31 // pred_region
          %191 = dma.done %s184, 2048
        $region36: #{tpu_custom_call.1} parent=31 // pred_fallthru
          _
        %s192 = sand.u32 %s28, 1
        %s193 = scalar_lea.sflag [#allocation3], %s192
        %s194 = sand.u32 %s28, 1
        %s195 = smul.addr %s194, 128
        %s196 = scalar_lea.vmem [#allocation2], %s195
        %p197 = pneg %p41
        %p198 = pneg %p38
        %p199 = pneg %p62
        %p200 = pneg %p59
        %p201 = pneg %p83
        %p202 = pneg %p80
        %p203 = pneg %p109
        %p204 = pneg %p106
        %s205 = smul.u32 16, %s20
        %p206 = scmp.lt.s32.totalorder %s205, 31
        %s207 = scalar_select %p206, %s205, 31
        %s208 = smul.addr %s207, 8
        %s209 = scalar_lea.vmem %s3, %s208
        %p210 = pneg %p130
        %p211 = pneg %p127
        %s212 = smul.u32 16, %s20
        %s213 = smul.u32 16, %s20
        %p214 = scmp.lt.s32.totalorder %s213, 31
        %s215 = scalar_select %p214, %s213, 31
        %s216 = smul.addr %s215, 8
        %s217 = scalar_lea.vmem %s3, %s216
        %s218 = smul.u32 16, %s20
        %p219 = scmp.eq.s32.totalorder %s20, 0
        // Predicated region
        $region37: #{tpu_custom_call.1} parent=31 // pred_check
          %p220 = pneg %p219
        $region38: #{tpu_custom_call.1} parent=31 // pred_check_branch
          %222 = sbr.rel (%p220) target = $region40
        $region39: #{tpu_custom_call.1} parent=31 // pred_region
          %vm223 = vcmask 24576
          %224 = vst.msk [vmem:[#allocation5] sm:$0x1] %vm223, 1e-06
        $region40: #{tpu_custom_call.1} parent=31 // pred_fallthru
          _
        %v225 = vld [vmem:[%s187] sm:$0xff]
        %v226 = vld [vmem:[%s187 + $0x8] sm:$0xff]
        %v227 = vld [vmem:[%s187 + $0x10] sm:$0xff]
        %v228 = vld [vmem:[%s187 + $0x18] sm:$0xff]
        %v229 = vld [vmem:[%s187 + $0x20] sm:$0xff]
        %v230 = vld [vmem:[%s187 + $0x28] sm:$0xff]
        %v231 = vld [vmem:[%s187 + $0x30] sm:$0xff]
        %v232 = vld [vmem:[%s187 + $0x38] sm:$0xff]
        %v233 = vld [vmem:[%s187 + $0x40] sm:$0xff]
        %v234 = vld [vmem:[%s187 + $0x48] sm:$0xff]
        %v235 = vld [vmem:[%s187 + $0x50] sm:$0xff]
        %v236 = vld [vmem:[%s187 + $0x58] sm:$0xff]
        %v237 = vld [vmem:[%s187 + $0x60] sm:$0xff]
        %v238 = vld [vmem:[%s187 + $0x68] sm:$0xff]
        %v239 = vld [vmem:[%s187 + $0x70] sm:$0xff]
        %v240 = vld [vmem:[%s187 + $0x78] sm:$0xff]
        %v241 = vld [vmem:[%s1] sm:$0xff]
        %v242 = vld [vmem:[%s1 + $0x8] sm:$0xff]
        %v243 = vld [vmem:[%s1 + $0x10] sm:$0xff]
        %v244 = vld [vmem:[%s1 + $0x18] sm:$0xff]
        %v245 = vld [vmem:[%s1 + $0x20] sm:$0xff]
        %v246 = vld [vmem:[%s1 + $0x28] sm:$0xff]
        %v247 = vld [vmem:[%s1 + $0x30] sm:$0xff]
        %v248 = vld [vmem:[%s1 + $0x38] sm:$0xff]
        %v249 = vld [vmem:[%s1 + $0x40] sm:$0xff]
        %v250 = vld [vmem:[%s1 + $0x48] sm:$0xff]
        %v251 = vld [vmem:[%s1 + $0x50] sm:$0xff]
        %v252 = vld [vmem:[%s1 + $0x58] sm:$0xff]
        %v253 = vld [vmem:[%s1 + $0x60] sm:$0xff]
        %v254 = vld [vmem:[%s1 + $0x68] sm:$0xff]
        %v255 = vld [vmem:[%s1 + $0x70] sm:$0xff]
        %v256 = vld [vmem:[%s1 + $0x78] sm:$0xff]
        %v257 = vld [vmem:[%s2] sm:$0x1]
        %v259 = vlaneseq
        %v260 = vshrl.u32 %v259, 7
        %v261 = vsub.s32 0, %v260
        %v262 = vrot.slane %v257, %v261
        %264 = vmatprep.subr.mxu0 0.0
        %265 = vmatpush1.msra.mxu0 %v241
        %266 = vmatprep.subr.mxu0 0.0
        %267 = vmatpush1.msra.mxu0 %v242
        %268 = vmatprep.subr.mxu0 0.0
        %269 = vmatpush1.msra.mxu0 %v243
        %270 = vmatprep.subr.mxu0 0.0
        %271 = vmatpush1.msra.mxu0 %v244
        %272 = vmatprep.subr.mxu0 0.0
        %273 = vmatpush1.msra.mxu0 %v245
        %274 = vmatprep.subr.mxu0 0.0
        %275 = vmatpush1.msra.mxu0 %v246
        %276 = vmatprep.subr.mxu0 0.0
        %277 = vmatpush1.msra.mxu0 %v247
        %278 = vmatprep.subr.mxu0 0.0
        %279 = vmatpush1.msra.mxu0 %v248
        %280 = vmatprep.subr.mxu0 0.0
        %281 = vmatpush1.msra.mxu0 %v249
        %282 = vmatprep.subr.mxu0 0.0
        %283 = vmatpush1.msra.mxu0 %v250
        %284 = vmatprep.subr.mxu0 0.0
        %285 = vmatpush1.msra.mxu0 %v251
        %286 = vmatprep.subr.mxu0 0.0
        %287 = vmatpush1.msra.mxu0 %v252
        %288 = vmatprep.subr.mxu0 0.0
        %289 = vmatpush1.msra.mxu0 %v253
        %290 = vmatprep.subr.mxu0 0.0
        %291 = vmatpush1.msra.mxu0 %v254
        %292 = vmatprep.subr.mxu0 0.0
        %293 = vmatpush1.msra.mxu0 %v255
        %294 = vmatprep.subr.mxu0 0.0
        %295 = vmatpush1.msra.mxu0 %v256
        %296 = vmatprep.subr.mxu0 0.0
        %297 = vmatpush1.msra.mxu0 0.0
        %298 = vmatprep.subr.mxu0 0.0
        %299 = vmatpush1.msra.mxu0 0.0
        %300 = vmatprep.subr.mxu0 0.0
        %301 = vmatpush1.msra.mxu0 0.0
        %302 = vmatprep.subr.mxu0 0.0
        %303 = vmatpush1.msra.mxu0 0.0
        %304 = vmatprep.subr.mxu0 0.0
        %305 = vmatpush1.msra.mxu0 0.0
        %306 = vmatprep.subr.mxu0 0.0
        %307 = vmatpush1.msra.mxu0 0.0
        %308 = vmatprep.subr.mxu0 0.0
        %309 = vmatpush1.msra.mxu0 0.0
        %310 = vmatprep.subr.mxu0 0.0
        %311 = vmatpush1.msra.mxu0 0.0
        %312 = vmatprep.subr.mxu0 0.0
        %313 = vmatpush1.msra.mxu0 0.0
        %314 = vmatprep.subr.mxu0 0.0
        %315 = vmatpush1.msra.mxu0 0.0
        %316 = vmatprep.subr.mxu0 0.0
        %317 = vmatpush1.msra.mxu0 0.0
        %318 = vmatprep.subr.mxu0 0.0
        %319 = vmatpush1.msra.mxu0 0.0
        %320 = vmatprep.subr.mxu0 0.0
        %321 = vmatpush1.msra.mxu0 0.0
        %322 = vmatprep.subr.mxu0 0.0
        %323 = vmatpush1.msra.mxu0 0.0
        %324 = vmatprep.subr.mxu0 0.0
        %325 = vmatpush1.msra.mxu0 0.0
        %326 = vmatprep.subr.mxu0 0.0
        %327 = vmatpush1.msra.mxu0 0.0
        %328 = vmatprep.mubr.f32.mxu0 0.0
        %329 = vmatmul.mubr.f32.gmra.mrb[0].mxu0 %v225
        %v330 = vpop.f32.mrb[0].mxu0
        %v331 = vadd.f32 %v262, %v330
        %v332 = vpop.f32.mrb[0].mxu0
        %333 = vmatprep.mubr.f32.mxu0 0.0
        %334 = vmatmul.mubr.f32.gmra.mrb[0].mxu0 %v226
        %v335 = vpop.f32.mrb[0].mxu0
        %v336 = vadd.f32 %v262, %v335
        %v337 = vpop.f32.mrb[0].mxu0
        %338 = vmatprep.mubr.f32.mxu0 0.0
        %339 = vmatmul.mubr.f32.gmra.mrb[0].mxu0 %v227
        %v340 = vpop.f32.mrb[0].mxu0
        %v341 = vadd.f32 %v262, %v340
        %v342 = vpop.f32.mrb[0].mxu0
        %343 = vmatprep.mubr.f32.mxu0 0.0
        %344 = vmatmul.mubr.f32.gmra.mrb[0].mxu0 %v228
        %v345 = vpop.f32.mrb[0].mxu0
        %v346 = vadd.f32 %v262, %v345
        %v347 = vpop.f32.mrb[0].mxu0
        %348 = vmatprep.mubr.f32.mxu0 0.0
        %349 = vmatmul.mubr.f32.gmra.mrb[0].mxu0 %v229
        %v350 = vpop.f32.mrb[0].mxu0
        %v351 = vadd.f32 %v262, %v350
        %v352 = vpop.f32.mrb[0].mxu0
        %353 = vmatprep.mubr.f32.mxu0 0.0
        %354 = vmatmul.mubr.f32.gmra.mrb[0].mxu0 %v230
        %v355 = vpop.f32.mrb[0].mxu0
        %v356 = vadd.f32 %v262, %v355
        %v357 = vpop.f32.mrb[0].mxu0
        %358 = vmatprep.mubr.f32.mxu0 0.0
        %359 = vmatmul.mubr.f32.gmra.mrb[0].mxu0 %v231
        %v360 = vpop.f32.mrb[0].mxu0
        %v361 = vadd.f32 %v262, %v360
        %v362 = vpop.f32.mrb[0].mxu0
        %363 = vmatprep.mubr.f32.mxu0 0.0
        %364 = vmatmul.mubr.f32.gmra.mrb[0].mxu0 %v232
        %v365 = vpop.f32.mrb[0].mxu0
        %v366 = vadd.f32 %v262, %v365
        %v367 = vpop.f32.mrb[0].mxu0
        %368 = vmatprep.mubr.f32.mxu0 0.0
        %369 = vmatmul.mubr.f32.gmra.mrb[0].mxu0 %v233
        %v370 = vpop.f32.mrb[0].mxu0
        %v371 = vadd.f32 %v262, %v370
        %v372 = vpop.f32.mrb[0].mxu0
        %373 = vmatprep.mubr.f32.mxu0 0.0
        %374 = vmatmul.mubr.f32.gmra.mrb[0].mxu0 %v234
        %v375 = vpop.f32.mrb[0].mxu0
        %v376 = vadd.f32 %v262, %v375
        %v377 = vpop.f32.mrb[0].mxu0
        %378 = vmatprep.mubr.f32.mxu0 0.0
        %379 = vmatmul.mubr.f32.gmra.mrb[0].mxu0 %v235
        %v380 = vpop.f32.mrb[0].mxu0
        %v381 = vadd.f32 %v262, %v380
        %v382 = vpop.f32.mrb[0].mxu0
        %383 = vmatprep.mubr.f32.mxu0 0.0
        %384 = vmatmul.mubr.f32.gmra.mrb[0].mxu0 %v236
        %v385 = vpop.f32.mrb[0].mxu0
        %v386 = vadd.f32 %v262, %v385
        %v387 = vpop.f32.mrb[0].mxu0
        %388 = vmatprep.mubr.f32.mxu0 0.0
        %389 = vmatmul.mubr.f32.gmra.mrb[0].mxu0 %v237
        %v390 = vpop.f32.mrb[0].mxu0
        %v391 = vadd.f32 %v262, %v390
        %v392 = vpop.f32.mrb[0].mxu0
        %393 = vmatprep.mubr.f32.mxu0 0.0
        %394 = vmatmul.mubr.f32.gmra.mrb[0].mxu0 %v238
        %v395 = vpop.f32.mrb[0].mxu0
        %v396 = vadd.f32 %v262, %v395
        %v397 = vpop.f32.mrb[0].mxu0
        %398 = vmatprep.mubr.f32.mxu0 0.0
        %399 = vmatmul.mubr.f32.gmra.mrb[0].mxu0 %v239
        %v400 = vpop.f32.mrb[0].mxu0
        %v401 = vadd.f32 %v262, %v400
        %v402 = vpop.f32.mrb[0].mxu0
        %403 = vmatprep.mubr.f32.mxu0 0.0
        %404 = vmatmul.mubr.f32.gmra.mrb[0].mxu0 %v240
        %v405 = vpop.f32.mrb[0].mxu0
        %v406 = vadd.f32 %v262, %v405
        %v407 = vpop.f32.mrb[0].mxu0
        %408 = vdwg.mxu0
        %vm409 = vcmask 31744
        %v410 = vsel %vm409, %v331, -inf
        %411 = vmax.xlane.f32.xlu0 %v410
        %v412 = vpop.xlane.xlu0 %411
        %v413 = vsel %vm409, %v336, -inf
        %414 = vmax.xlane.f32.xlu0 %v413
        %v415 = vpop.xlane.xlu0 %414
        %v416 = vsel %vm409, %v341, -inf
        %417 = vmax.xlane.f32.xlu0 %v416
        %v418 = vpop.xlane.xlu0 %417
        %v419 = vsel %vm409, %v346, -inf
        %420 = vmax.xlane.f32.xlu0 %v419
        %v421 = vpop.xlane.xlu0 %420
        %v422 = vsel %vm409, %v351, -inf
        %423 = vmax.xlane.f32.xlu0 %v422
        %v424 = vpop.xlane.xlu0 %423
        %v425 = vsel %vm409, %v356, -inf
        %426 = vmax.xlane.f32.xlu0 %v425
        %v427 = vpop.xlane.xlu0 %426
        %v428 = vsel %vm409, %v361, -inf
        %429 = vmax.xlane.f32.xlu0 %v428
        %v430 = vpop.xlane.xlu0 %429
        %v431 = vsel %vm409, %v366, -inf
        %432 = vmax.xlane.f32.xlu0 %v431
        %v433 = vpop.xlane.xlu0 %432
        %v434 = vsel %vm409, %v371, -inf
        %435 = vmax.xlane.f32.xlu0 %v434
        %v436 = vpop.xlane.xlu0 %435
        %v437 = vsel %vm409, %v376, -inf
        %438 = vmax.xlane.f32.xlu0 %v437
        %v439 = vpop.xlane.xlu0 %438
        %v440 = vsel %vm409, %v381, -inf
        %441 = vmax.xlane.f32.xlu0 %v440
        %v442 = vpop.xlane.xlu0 %441
        %v443 = vsel %vm409, %v386, -inf
        %444 = vmax.xlane.f32.xlu0 %v443
        %v445 = vpop.xlane.xlu0 %444
        %v446 = vsel %vm409, %v391, -inf
        %447 = vmax.xlane.f32.xlu0 %v446
        %v448 = vpop.xlane.xlu0 %447
        %v449 = vsel %vm409, %v396, -inf
        %450 = vmax.xlane.f32.xlu0 %v449
        %v451 = vpop.xlane.xlu0 %450
        %v452 = vsel %vm409, %v401, -inf
        %453 = vmax.xlane.f32.xlu0 %v452
        %v454 = vpop.xlane.xlu0 %453
        %v455 = vsel %vm409, %v406, -inf
        %456 = vmax.xlane.f32.xlu0 %v455
        %v457 = vpop.xlane.xlu0 %456
        %v458 = vsub.f32 %v331, %v412
        %v459 = vsub.f32 %v336, %v415
        %v460 = vsub.f32 %v341, %v418
        %v461 = vsub.f32 %v346, %v421
        %v462 = vsub.f32 %v351, %v424
        %v463 = vsub.f32 %v356, %v427
        %v464 = vsub.f32 %v361, %v430
        %v465 = vsub.f32 %v366, %v433
        %v466 = vsub.f32 %v371, %v436
        %v467 = vsub.f32 %v376, %v439
        %v468 = vsub.f32 %v381, %v442
        %v469 = vsub.f32 %v386, %v445
        %v470 = vsub.f32 %v391, %v448
        %v471 = vsub.f32 %v396, %v451
        %v472 = vsub.f32 %v401, %v454
        %v473 = vsub.f32 %v406, %v457
        %v474 = vmul.f32 %v458, 1.442695
        %v475 = vpow.pop %v474
        %v476 = vmul.f32 %v459, 1.442695
        %v477 = vpow.pop %v476
        %v478 = vmul.f32 %v460, 1.442695
        %v479 = vpow.pop %v478
        %v480 = vmul.f32 %v461, 1.442695
        %v481 = vpow.pop %v480
        %v482 = vmul.f32 %v462, 1.442695
        %v483 = vpow.pop %v482
        %v484 = vmul.f32 %v463, 1.442695
        %v485 = vpow.pop %v484
        %v486 = vmul.f32 %v464, 1.442695
        %v487 = vpow.pop %v486
        %v488 = vmul.f32 %v465, 1.442695
        %v489 = vpow.pop %v488
        %v490 = vmul.f32 %v466, 1.442695
        %v491 = vpow.pop %v490
        %v492 = vmul.f32 %v467, 1.442695
        %v493 = vpow.pop %v492
        %v494 = vmul.f32 %v468, 1.442695
        %v495 = vpow.pop %v494
        %v496 = vmul.f32 %v469, 1.442695
        %v497 = vpow.pop %v496
        %v498 = vmul.f32 %v470, 1.442695
        %v499 = vpow.pop %v498
        %v500 = vmul.f32 %v471, 1.442695
        %v501 = vpow.pop %v500
        %v502 = vmul.f32 %v472, 1.442695
        %v503 = vpow.pop %v502
        %v504 = vmul.f32 %v473, 1.442695
        %v505 = vpow.pop %v504
        %v506 = vsel %vm409, %v475, 0.0
        %507 = vadd.xlane.f32.xlu0 %v506
        %v508 = vpop.xlane.xlu0 %507
        %v509 = vsel %vm409, %v477, 0.0
        %510 = vadd.xlane.f32.xlu0 %v509
        %v511 = vpop.xlane.xlu0 %510
        %v512 = vsel %vm409, %v479, 0.0
        %513 = vadd.xlane.f32.xlu0 %v512
        %v514 = vpop.xlane.xlu0 %513
        %v515 = vsel %vm409, %v481, 0.0
        %516 = vadd.xlane.f32.xlu0 %v515
        %v517 = vpop.xlane.xlu0 %516
        %v518 = vsel %vm409, %v483, 0.0
        %519 = vadd.xlane.f32.xlu0 %v518
        %v520 = vpop.xlane.xlu0 %519
        %v521 = vsel %vm409, %v485, 0.0
        %522 = vadd.xlane.f32.xlu0 %v521
        %v523 = vpop.xlane.xlu0 %522
        %v524 = vsel %vm409, %v487, 0.0
        %525 = vadd.xlane.f32.xlu0 %v524
        %v526 = vpop.xlane.xlu0 %525
        %v527 = vsel %vm409, %v489, 0.0
        %528 = vadd.xlane.f32.xlu0 %v527
        %v529 = vpop.xlane.xlu0 %528
        %v530 = vsel %vm409, %v491, 0.0
        %531 = vadd.xlane.f32.xlu0 %v530
        %v532 = vpop.xlane.xlu0 %531
        %v533 = vsel %vm409, %v493, 0.0
        %534 = vadd.xlane.f32.xlu0 %v533
        %v535 = vpop.xlane.xlu0 %534
        %v536 = vsel %vm409, %v495, 0.0
        %537 = vadd.xlane.f32.xlu0 %v536
        %v538 = vpop.xlane.xlu0 %537
        %v539 = vsel %vm409, %v497, 0.0
        %540 = vadd.xlane.f32.xlu0 %v539
        %v541 = vpop.xlane.xlu0 %540
        %v542 = vsel %vm409, %v499, 0.0
        %543 = vadd.xlane.f32.xlu0 %v542
        %v544 = vpop.xlane.xlu0 %543
        %v545 = vsel %vm409, %v501, 0.0
        %546 = vadd.xlane.f32.xlu0 %v545
        %v547 = vpop.xlane.xlu0 %546
        %v548 = vsel %vm409, %v503, 0.0
        %549 = vadd.xlane.f32.xlu0 %v548
        %v550 = vpop.xlane.xlu0 %549
        %v551 = vsel %vm409, %v505, 0.0
        %552 = vadd.xlane.f32.xlu0 %v551
        %v553 = vpop.xlane.xlu0 %552
        %v554 = vrcp.pop %v508
        %v555 = vmul.f32 %v475, %v554
        %v556 = vrcp.pop %v511
        %v557 = vmul.f32 %v477, %v556
        %v558 = vrcp.pop %v514
        %v559 = vmul.f32 %v479, %v558
        %v560 = vrcp.pop %v517
        %v561 = vmul.f32 %v481, %v560
        %v562 = vrcp.pop %v520
        %v563 = vmul.f32 %v483, %v562
        %v564 = vrcp.pop %v523
        %v565 = vmul.f32 %v485, %v564
        %v566 = vrcp.pop %v526
        %v567 = vmul.f32 %v487, %v566
        %v568 = vrcp.pop %v529
        %v569 = vmul.f32 %v489, %v568
        %v570 = vrcp.pop %v532
        %v571 = vmul.f32 %v491, %v570
        %v572 = vrcp.pop %v535
        %v573 = vmul.f32 %v493, %v572
        %v574 = vrcp.pop %v538
        %v575 = vmul.f32 %v495, %v574
        %v576 = vrcp.pop %v541
        %v577 = vmul.f32 %v497, %v576
        %v578 = vrcp.pop %v544
        %v579 = vmul.f32 %v499, %v578
        %v580 = vrcp.pop %v547
        %v581 = vmul.f32 %v501, %v580
        %v582 = vrcp.pop %v550
        %v583 = vmul.f32 %v503, %v582
        %v584 = vrcp.pop %v553
        %v585 = vmul.f32 %v505, %v584
        %v586 = vlaneseq
        %v587 = vand.u32 %v586, 127
        %v588 = vsel %vm409, %v555, -inf
        %589 = vmax.xlane.f32.xlu0 %v588
        %v590 = vpop.xlane.xlu0 %589
        %v591 = vsel %vm409, %v557, -inf
        %592 = vmax.xlane.f32.xlu0 %v591
        %v593 = vpop.xlane.xlu0 %592
        %v594 = vsel %vm409, %v559, -inf
        %595 = vmax.xlane.f32.xlu0 %v594
        %v596 = vpop.xlane.xlu0 %595
        %v597 = vsel %vm409, %v561, -inf
        %598 = vmax.xlane.f32.xlu0 %v597
        %v599 = vpop.xlane.xlu0 %598
        %v600 = vsel %vm409, %v563, -inf
        %601 = vmax.xlane.f32.xlu0 %v600
        %v602 = vpop.xlane.xlu0 %601
        %v603 = vsel %vm409, %v565, -inf
        %604 = vmax.xlane.f32.xlu0 %v603
        %v605 = vpop.xlane.xlu0 %604
        %v606 = vsel %vm409, %v567, -inf
        %607 = vmax.xlane.f32.xlu0 %v606
        %v608 = vpop.xlane.xlu0 %607
        %v609 = vsel %vm409, %v569, -inf
        %610 = vmax.xlane.f32.xlu0 %v609
        %v611 = vpop.xlane.xlu0 %610
        %v612 = vsel %vm409, %v571, -inf
        %613 = vmax.xlane.f32.xlu0 %v612
        %v614 = vpop.xlane.xlu0 %613
        %v615 = vsel %vm409, %v573, -inf
        %616 = vmax.xlane.f32.xlu0 %v615
        %v617 = vpop.xlane.xlu0 %616
        %v618 = vsel %vm409, %v575, -inf
        %619 = vmax.xlane.f32.xlu0 %v618
        %v620 = vpop.xlane.xlu0 %619
        %v621 = vsel %vm409, %v577, -inf
        %622 = vmax.xlane.f32.xlu0 %v621
        %v623 = vpop.xlane.xlu0 %622
        %v624 = vsel %vm409, %v579, -inf
        %625 = vmax.xlane.f32.xlu0 %v624
        %v626 = vpop.xlane.xlu0 %625
        %v627 = vsel %vm409, %v581, -inf
        %628 = vmax.xlane.f32.xlu0 %v627
        %v629 = vpop.xlane.xlu0 %628
        %v630 = vsel %vm409, %v583, -inf
        %631 = vmax.xlane.f32.xlu0 %v630
        %v632 = vpop.xlane.xlu0 %631
        %v633 = vsel %vm409, %v585, -inf
        %634 = vmax.xlane.f32.xlu0 %v633
        %v635 = vpop.xlane.xlu0 %634
        %vm636 = vcmp.ge.f32.partialorder %v555, %v590
        %vm637 = vcmp.ge.f32.partialorder %v557, %v593
        %vm638 = vcmp.ge.f32.partialorder %v559, %v596
        %vm639 = vcmp.ge.f32.partialorder %v561, %v599
        %vm640 = vcmp.ge.f32.partialorder %v563, %v602
        %vm641 = vcmp.ge.f32.partialorder %v565, %v605
        %vm642 = vcmp.ge.f32.partialorder %v567, %v608
        %vm643 = vcmp.ge.f32.partialorder %v569, %v611
        %vm644 = vcmp.ge.f32.partialorder %v571, %v614
        %vm645 = vcmp.ge.f32.partialorder %v573, %v617
        %vm646 = vcmp.ge.f32.partialorder %v575, %v620
        %vm647 = vcmp.ge.f32.partialorder %v577, %v623
        %vm648 = vcmp.ge.f32.partialorder %v579, %v626
        %vm649 = vcmp.ge.f32.partialorder %v581, %v629
        %vm650 = vcmp.ge.f32.partialorder %v583, %v632
        %vm651 = vcmp.ge.f32.partialorder %v585, %v635
        %v652 = vsel %vm636, %v587, 4
        %v653 = vsel %vm637, %v587, 4
        %v654 = vsel %vm638, %v587, 4
        %v655 = vsel %vm639, %v587, 4
        %v656 = vsel %vm640, %v587, 4
        %v657 = vsel %vm641, %v587, 4
        %v658 = vsel %vm642, %v587, 4
        %v659 = vsel %vm643, %v587, 4
        %v660 = vsel %vm644, %v587, 4
        %v661 = vsel %vm645, %v587, 4
        %v662 = vsel %vm646, %v587, 4
        %v663 = vsel %vm647, %v587, 4
        %v664 = vsel %vm648, %v587, 4
        %v665 = vsel %vm649, %v587, 4
        %v666 = vsel %vm650, %v587, 4
        %v667 = vsel %vm651, %v587, 4
        %v668 = vsel %vm409, %v652, 2147483647
        %v669 = vand.u32 %v668, 65535
        %v670 = vshra.s32 %v668, 16
        %v671 = vcvt.s32.f32 %v669
        %v672 = vcvt.s32.f32 %v670
        %673 = vmin.xlane.f32.xlu0 %v672
        %v674 = vpop.xlane.xlu0 %673
        %vm675 = vcmp.eq.f32.partialorder %v672, %v674
        %v676 = vsel %vm675, %v671, inf
        %677 = vmin.xlane.f32.xlu0 %v676
        %v678 = vpop.xlane.xlu0 %677
        %v679 = vcvt.f32.s32 %v678
        %v680 = vcvt.f32.s32 %v674
        %v681 = vshll.u32 %v680, 16
        %v682 = vadd.s32 %v681, %v679
        %v683 = vsel %vm409, %v653, 2147483647
        %v684 = vand.u32 %v683, 65535
        %v685 = vshra.s32 %v683, 16
        %v686 = vcvt.s32.f32 %v684
        %v687 = vcvt.s32.f32 %v685
        %688 = vmin.xlane.f32.xlu0 %v687
        %v689 = vpop.xlane.xlu0 %688
        %vm690 = vcmp.eq.f32.partialorder %v687, %v689
        %v691 = vsel %vm690, %v686, inf
        %692 = vmin.xlane.f32.xlu0 %v691
        %v693 = vpop.xlane.xlu0 %692
        %v694 = vcvt.f32.s32 %v693
        %v695 = vcvt.f32.s32 %v689
        %v696 = vshll.u32 %v695, 16
        %v697 = vadd.s32 %v696, %v694
        %v698 = vsel %vm409, %v654, 2147483647
        %v699 = vand.u32 %v698, 65535
        %v700 = vshra.s32 %v698, 16
        %v701 = vcvt.s32.f32 %v699
        %v702 = vcvt.s32.f32 %v700
        %703 = vmin.xlane.f32.xlu0 %v702
        %v704 = vpop.xlane.xlu0 %703
        %vm705 = vcmp.eq.f32.partialorder %v702, %v704
        %v706 = vsel %vm705, %v701, inf
        %707 = vmin.xlane.f32.xlu0 %v706
        %v708 = vpop.xlane.xlu0 %707
        %v709 = vcvt.f32.s32 %v708
        %v710 = vcvt.f32.s32 %v704
        %v711 = vshll.u32 %v710, 16
        %v712 = vadd.s32 %v711, %v709
        %v713 = vsel %vm409, %v655, 2147483647
        %v714 = vand.u32 %v713, 65535
        %v715 = vshra.s32 %v713, 16
        %v716 = vcvt.s32.f32 %v714
        %v717 = vcvt.s32.f32 %v715
        %718 = vmin.xlane.f32.xlu0 %v717
        %v719 = vpop.xlane.xlu0 %718
        %vm720 = vcmp.eq.f32.partialorder %v717, %v719
        %v721 = vsel %vm720, %v716, inf
        %722 = vmin.xlane.f32.xlu0 %v721
        %v723 = vpop.xlane.xlu0 %722
        %v724 = vcvt.f32.s32 %v723
        %v725 = vcvt.f32.s32 %v719
        %v726 = vshll.u32 %v725, 16
        %v727 = vadd.s32 %v726, %v724
        %v728 = vsel %vm409, %v656, 2147483647
        %v729 = vand.u32 %v728, 65535
        %v730 = vshra.s32 %v728, 16
        %v731 = vcvt.s32.f32 %v729
        %v732 = vcvt.s32.f32 %v730
        %733 = vmin.xlane.f32.xlu0 %v732
        %v734 = vpop.xlane.xlu0 %733
        %vm735 = vcmp.eq.f32.partialorder %v732, %v734
        %v736 = vsel %vm735, %v731, inf
        %737 = vmin.xlane.f32.xlu0 %v736
        %v738 = vpop.xlane.xlu0 %737
        %v739 = vcvt.f32.s32 %v738
        %v740 = vcvt.f32.s32 %v734
        %v741 = vshll.u32 %v740, 16
        %v742 = vadd.s32 %v741, %v739
        %v743 = vsel %vm409, %v657, 2147483647
        %v744 = vand.u32 %v743, 65535
        %v745 = vshra.s32 %v743, 16
        %v746 = vcvt.s32.f32 %v744
        %v747 = vcvt.s32.f32 %v745
        %748 = vmin.xlane.f32.xlu0 %v747
        %v749 = vpop.xlane.xlu0 %748
        %vm750 = vcmp.eq.f32.partialorder %v747, %v749
        %v751 = vsel %vm750, %v746, inf
        %752 = vmin.xlane.f32.xlu0 %v751
        %v753 = vpop.xlane.xlu0 %752
        %v754 = vcvt.f32.s32 %v753
        %v755 = vcvt.f32.s32 %v749
        %v756 = vshll.u32 %v755, 16
        %v757 = vadd.s32 %v756, %v754
        %v758 = vsel %vm409, %v658, 2147483647
        %v759 = vand.u32 %v758, 65535
        %v760 = vshra.s32 %v758, 16
        %v761 = vcvt.s32.f32 %v759
        %v762 = vcvt.s32.f32 %v760
        %763 = vmin.xlane.f32.xlu0 %v762
        %v764 = vpop.xlane.xlu0 %763
        %vm765 = vcmp.eq.f32.partialorder %v762, %v764
        %v766 = vsel %vm765, %v761, inf
        %767 = vmin.xlane.f32.xlu0 %v766
        %v768 = vpop.xlane.xlu0 %767
        %v769 = vcvt.f32.s32 %v768
        %v770 = vcvt.f32.s32 %v764
        %v771 = vshll.u32 %v770, 16
        %v772 = vadd.s32 %v771, %v769
        %v773 = vsel %vm409, %v659, 2147483647
        %v774 = vand.u32 %v773, 65535
        %v775 = vshra.s32 %v773, 16
        %v776 = vcvt.s32.f32 %v774
        %v777 = vcvt.s32.f32 %v775
        %778 = vmin.xlane.f32.xlu0 %v777
        %v779 = vpop.xlane.xlu0 %778
        %vm780 = vcmp.eq.f32.partialorder %v777, %v779
        %v781 = vsel %vm780, %v776, inf
        %782 = vmin.xlane.f32.xlu0 %v781
        %v783 = vpop.xlane.xlu0 %782
        %v784 = vcvt.f32.s32 %v783
        %v785 = vcvt.f32.s32 %v779
        %v786 = vshll.u32 %v785, 16
        %v787 = vadd.s32 %v786, %v784
        %v788 = vsel %vm409, %v660, 2147483647
        %v789 = vand.u32 %v788, 65535
        %v790 = vshra.s32 %v788, 16
        %v791 = vcvt.s32.f32 %v789
        %v792 = vcvt.s32.f32 %v790
        %793 = vmin.xlane.f32.xlu0 %v792
        %v794 = vpop.xlane.xlu0 %793
        %vm795 = vcmp.eq.f32.partialorder %v792, %v794
        %v796 = vsel %vm795, %v791, inf
        %797 = vmin.xlane.f32.xlu0 %v796
        %v798 = vpop.xlane.xlu0 %797
        %v799 = vcvt.f32.s32 %v798
        %v800 = vcvt.f32.s32 %v794
        %v801 = vshll.u32 %v800, 16
        %v802 = vadd.s32 %v801, %v799
        %v803 = vsel %vm409, %v661, 2147483647
        %v804 = vand.u32 %v803, 65535
        %v805 = vshra.s32 %v803, 16
        %v806 = vcvt.s32.f32 %v804
        %v807 = vcvt.s32.f32 %v805
        %808 = vmin.xlane.f32.xlu0 %v807
        %v809 = vpop.xlane.xlu0 %808
        %vm810 = vcmp.eq.f32.partialorder %v807, %v809
        %v811 = vsel %vm810, %v806, inf
        %812 = vmin.xlane.f32.xlu0 %v811
        %v813 = vpop.xlane.xlu0 %812
        %v814 = vcvt.f32.s32 %v813
        %v815 = vcvt.f32.s32 %v809
        %v816 = vshll.u32 %v815, 16
        %v817 = vadd.s32 %v816, %v814
        %v818 = vsel %vm409, %v662, 2147483647
        %v819 = vand.u32 %v818, 65535
        %v820 = vshra.s32 %v818, 16
        %v821 = vcvt.s32.f32 %v819
        %v822 = vcvt.s32.f32 %v820
        %823 = vmin.xlane.f32.xlu0 %v822
        %v824 = vpop.xlane.xlu0 %823
        %vm825 = vcmp.eq.f32.partialorder %v822, %v824
        %v826 = vsel %vm825, %v821, inf
        %827 = vmin.xlane.f32.xlu0 %v826
        %v828 = vpop.xlane.xlu0 %827
        %v829 = vcvt.f32.s32 %v828
        %v830 = vcvt.f32.s32 %v824
        %v831 = vshll.u32 %v830, 16
        %v832 = vadd.s32 %v831, %v829
        %v833 = vsel %vm409, %v663, 2147483647
        %v834 = vand.u32 %v833, 65535
        %v835 = vshra.s32 %v833, 16
        %v836 = vcvt.s32.f32 %v834
        %v837 = vcvt.s32.f32 %v835
        %838 = vmin.xlane.f32.xlu0 %v837
        %v839 = vpop.xlane.xlu0 %838
        %vm840 = vcmp.eq.f32.partialorder %v837, %v839
        %v841 = vsel %vm840, %v836, inf
        %842 = vmin.xlane.f32.xlu0 %v841
        %v843 = vpop.xlane.xlu0 %842
        %v844 = vcvt.f32.s32 %v843
        %v845 = vcvt.f32.s32 %v839
        %v846 = vshll.u32 %v845, 16
        %v847 = vadd.s32 %v846, %v844
        %v848 = vsel %vm409, %v664, 2147483647
        %v849 = vand.u32 %v848, 65535
        %v850 = vshra.s32 %v848, 16
        %v851 = vcvt.s32.f32 %v849
        %v852 = vcvt.s32.f32 %v850
        %853 = vmin.xlane.f32.xlu0 %v852
        %v854 = vpop.xlane.xlu0 %853
        %vm855 = vcmp.eq.f32.partialorder %v852, %v854
        %v856 = vsel %vm855, %v851, inf
        %857 = vmin.xlane.f32.xlu0 %v856
        %v858 = vpop.xlane.xlu0 %857
        %v859 = vcvt.f32.s32 %v858
        %v860 = vcvt.f32.s32 %v854
        %v861 = vshll.u32 %v860, 16
        %v862 = vadd.s32 %v861, %v859
        %v863 = vsel %vm409, %v665, 2147483647
        %v864 = vand.u32 %v863, 65535
        %v865 = vshra.s32 %v863, 16
        %v866 = vcvt.s32.f32 %v864
        %v867 = vcvt.s32.f32 %v865
        %868 = vmin.xlane.f32.xlu0 %v867
        %v869 = vpop.xlane.xlu0 %868
        %vm870 = vcmp.eq.f32.partialorder %v867, %v869
        %v871 = vsel %vm870, %v866, inf
        %872 = vmin.xlane.f32.xlu0 %v871
        %v873 = vpop.xlane.xlu0 %872
        %v874 = vcvt.f32.s32 %v873
        %v875 = vcvt.f32.s32 %v869
        %v876 = vshll.u32 %v875, 16
        %v877 = vadd.s32 %v876, %v874
        %v878 = vsel %vm409, %v666, 2147483647
        %v879 = vand.u32 %v878, 65535
        %v880 = vshra.s32 %v878, 16
        %v881 = vcvt.s32.f32 %v879
        %v882 = vcvt.s32.f32 %v880
        %883 = vmin.xlane.f32.xlu0 %v882
        %v884 = vpop.xlane.xlu0 %883
        %vm885 = vcmp.eq.f32.partialorder %v882, %v884
        %v886 = vsel %vm885, %v881, inf
        %887 = vmin.xlane.f32.xlu0 %v886
        %v888 = vpop.xlane.xlu0 %887
        %v889 = vcvt.f32.s32 %v888
        %v890 = vcvt.f32.s32 %v884
        %v891 = vshll.u32 %v890, 16
        %v892 = vadd.s32 %v891, %v889
        %v893 = vsel %vm409, %v667, 2147483647
        %v894 = vand.u32 %v893, 65535
        %v895 = vshra.s32 %v893, 16
        %v896 = vcvt.s32.f32 %v894
        %v897 = vcvt.s32.f32 %v895
        %898 = vmin.xlane.f32.xlu0 %v897
        %v899 = vpop.xlane.xlu0 %898
        %vm900 = vcmp.eq.f32.partialorder %v897, %v899
        %v901 = vsel %vm900, %v896, inf
        %902 = vmin.xlane.f32.xlu0 %v901
        %v903 = vpop.xlane.xlu0 %902
        %v904 = vcvt.f32.s32 %v903
        %v905 = vcvt.f32.s32 %v899
        %v906 = vshll.u32 %v905, 16
        %v907 = vadd.s32 %v906, %v904
        %vm908 = vcmp.eq.s32.totalorder %v587, %v682
        %vm909 = vcmp.eq.s32.totalorder %v587, %v697
        %vm910 = vcmp.eq.s32.totalorder %v587, %v712
        %vm911 = vcmp.eq.s32.totalorder %v587, %v727
        %vm912 = vcmp.eq.s32.totalorder %v587, %v742
        %vm913 = vcmp.eq.s32.totalorder %v587, %v757
        %vm914 = vcmp.eq.s32.totalorder %v587, %v772
        %vm915 = vcmp.eq.s32.totalorder %v587, %v787
        %vm916 = vcmp.eq.s32.totalorder %v587, %v802
        %vm917 = vcmp.eq.s32.totalorder %v587, %v817
        %vm918 = vcmp.eq.s32.totalorder %v587, %v832
        %vm919 = vcmp.eq.s32.totalorder %v587, %v847
        %vm920 = vcmp.eq.s32.totalorder %v587, %v862
        %vm921 = vcmp.eq.s32.totalorder %v587, %v877
        %vm922 = vcmp.eq.s32.totalorder %v587, %v892
        %vm923 = vcmp.eq.s32.totalorder %v587, %v907
        %v924 = vsel %vm908, 1, 0
        %v925 = vsel %vm909, 1, 0
        %v926 = vsel %vm910, 1, 0
        %v927 = vsel %vm911, 1, 0
        %v928 = vsel %vm912, 1, 0
        %v929 = vsel %vm913, 1, 0
        %v930 = vsel %vm914, 1, 0
        %v931 = vsel %vm915, 1, 0
        %v932 = vsel %vm916, 1, 0
        %v933 = vsel %vm917, 1, 0
        %v934 = vsel %vm918, 1, 0
        %v935 = vsel %vm919, 1, 0
        %v936 = vsel %vm920, 1, 0
        %v937 = vsel %vm921, 1, 0
        %v938 = vsel %vm922, 1, 0
        %v939 = vsel %vm923, 1, 0
        %v940 = vcvt.s32.f32 %v924
        %v941 = vcvt.s32.f32 %v925
        %v942 = vcvt.s32.f32 %v926
        %v943 = vcvt.s32.f32 %v927
        %v944 = vcvt.s32.f32 %v928
        %v945 = vcvt.s32.f32 %v929
        %v946 = vcvt.s32.f32 %v930
        %v947 = vcvt.s32.f32 %v931
        %v948 = vcvt.s32.f32 %v932
        %v949 = vcvt.s32.f32 %v933
        %v950 = vcvt.s32.f32 %v934
        %v951 = vcvt.s32.f32 %v935
        %v952 = vcvt.s32.f32 %v936
        %v953 = vcvt.s32.f32 %v937
        %v954 = vcvt.s32.f32 %v938
        %v955 = vcvt.s32.f32 %v939
        %v956 = vmul.f32 %v555, %v940
        %v957 = vmul.f32 %v557, %v941
        %v958 = vmul.f32 %v559, %v942
        %v959 = vmul.f32 %v561, %v943
        %v960 = vmul.f32 %v563, %v944
        %v961 = vmul.f32 %v565, %v945
        %v962 = vmul.f32 %v567, %v946
        %v963 = vmul.f32 %v569, %v947
        %v964 = vmul.f32 %v571, %v948
        %v965 = vmul.f32 %v573, %v949
        %v966 = vmul.f32 %v575, %v950
        %v967 = vmul.f32 %v577, %v951
        %v968 = vmul.f32 %v579, %v952
        %v969 = vmul.f32 %v581, %v953
        %v970 = vmul.f32 %v583, %v954
        %v971 = vmul.f32 %v585, %v955
        %v972 = vlaneseq
        %v973 = vshrl.u32 %v972, 7
        %v974 = vadd.s32 %v973, 8
        %v975 = vadd.s32 %v973, 16
        %v976 = vadd.s32 %v973, 24
        %v977 = vadd.s32 %v973, 32
        %v978 = vadd.s32 %v973, 40
        %v979 = vadd.s32 %v973, 48
        %v980 = vadd.s32 %v973, 56
        %v981 = vadd.s32 %v973, 64
        %v982 = vadd.s32 %v973, 72
        %v983 = vadd.s32 %v973, 80
        %v984 = vadd.s32 %v973, 88
        %v985 = vadd.s32 %v973, 96
        %v986 = vadd.s32 %v973, 104
        %v987 = vadd.s32 %v973, 112
        %v988 = vadd.s32 %v973, 120
        %s989 = smul.u32 %s20, 128
        %v990 = vstv %s989
        %v991 = vadd.s32 %v973, %v990
        %v992 = vadd.s32 %v974, %v990
        %v993 = vadd.s32 %v975, %v990
        %v994 = vadd.s32 %v976, %v990
        %v995 = vadd.s32 %v977, %v990
        %v996 = vadd.s32 %v978, %v990
        %v997 = vadd.s32 %v979, %v990
        %v998 = vadd.s32 %v980, %v990
        %v999 = vadd.s32 %v981, %v990
        %v1000 = vadd.s32 %v982, %v990
        %v1001 = vadd.s32 %v983, %v990
        %v1002 = vadd.s32 %v984, %v990
        %v1003 = vadd.s32 %v985, %v990
        %v1004 = vadd.s32 %v986, %v990
        %v1005 = vadd.s32 %v987, %v990
        %v1006 = vadd.s32 %v988, %v990
        %vm1007 = vcmp.lt.s32.totalorder %v991, 256
        %vm1008 = vcmp.lt.s32.totalorder %v992, 256
        %vm1009 = vcmp.lt.s32.totalorder %v993, 256
        %vm1010 = vcmp.lt.s32.totalorder %v994, 256
        %vm1011 = vcmp.lt.s32.totalorder %v995, 256
        %vm1012 = vcmp.lt.s32.totalorder %v996, 256
        %vm1013 = vcmp.lt.s32.totalorder %v997, 256
        %vm1014 = vcmp.lt.s32.totalorder %v998, 256
        %vm1015 = vcmp.lt.s32.totalorder %v999, 256
        %vm1016 = vcmp.lt.s32.totalorder %v1000, 256
        %vm1017 = vcmp.lt.s32.totalorder %v1001, 256
        %vm1018 = vcmp.lt.s32.totalorder %v1002, 256
        %vm1019 = vcmp.lt.s32.totalorder %v1003, 256
        %vm1020 = vcmp.lt.s32.totalorder %v1004, 256
        %vm1021 = vcmp.lt.s32.totalorder %v1005, 256
        %vm1022 = vcmp.lt.s32.totalorder %v1006, 256
        %v1023 = vsel %vm1007, %v956, 0.0
        %v1024 = vsel %vm1008, %v957, 0.0
        %v1025 = vsel %vm1009, %v958, 0.0
        %v1026 = vsel %vm1010, %v959, 0.0
        %v1027 = vsel %vm1011, %v960, 0.0
        %v1028 = vsel %vm1012, %v961, 0.0
        %v1029 = vsel %vm1013, %v962, 0.0
        %v1030 = vsel %vm1014, %v963, 0.0
        %v1031 = vsel %vm1015, %v964, 0.0
        %v1032 = vsel %vm1016, %v965, 0.0
        %v1033 = vsel %vm1017, %v966, 0.0
        %v1034 = vsel %vm1018, %v967, 0.0
        %v1035 = vsel %vm1019, %v968, 0.0
        %v1036 = vsel %vm1020, %v969, 0.0
        %v1037 = vsel %vm1021, %v970, 0.0
        %v1038 = vsel %vm1022, %v971, 0.0
        %1039 = vst.msk [vmem:[%s217] sm:$0xff] %vm409, %v1023
        %1040 = vst.msk [vmem:[%s217 + $0x8] sm:$0xff] %vm409, %v1024
        %1041 = vst.msk [vmem:[%s217 + $0x10] sm:$0xff] %vm409, %v1025
        %1042 = vst.msk [vmem:[%s217 + $0x18] sm:$0xff] %vm409, %v1026
        %1043 = vst.msk [vmem:[%s217 + $0x20] sm:$0xff] %vm409, %v1027
        %1044 = vst.msk [vmem:[%s217 + $0x28] sm:$0xff] %vm409, %v1028
        %1045 = vst.msk [vmem:[%s217 + $0x30] sm:$0xff] %vm409, %v1029
        %1046 = vst.msk [vmem:[%s217 + $0x38] sm:$0xff] %vm409, %v1030
        %1047 = vst.msk [vmem:[%s217 + $0x40] sm:$0xff] %vm409, %v1031
        %1048 = vst.msk [vmem:[%s217 + $0x48] sm:$0xff] %vm409, %v1032
        %1049 = vst.msk [vmem:[%s217 + $0x50] sm:$0xff] %vm409, %v1033
        %1050 = vst.msk [vmem:[%s217 + $0x58] sm:$0xff] %vm409, %v1034
        %1051 = vst.msk [vmem:[%s217 + $0x60] sm:$0xff] %vm409, %v1035
        %1052 = vst.msk [vmem:[%s217 + $0x68] sm:$0xff] %vm409, %v1036
        %1053 = vst.msk [vmem:[%s217 + $0x70] sm:$0xff] %vm409, %v1037
        %1054 = vst.msk [vmem:[%s217 + $0x78] sm:$0xff] %vm409, %v1038
        %v1055 = vld [vmem:[#allocation5] sm:$0x1]
        %v1056 = vsel %vm409, %v1023, 0.0
        %v1057 = vsel %vm409, %v1024, 0.0
        %v1058 = vadd.f32 %v1056, %v1057
        %v1059 = vsel %vm409, %v1025, 0.0
        %v1060 = vadd.f32 %v1058, %v1059
        %v1061 = vsel %vm409, %v1026, 0.0
        %v1062 = vadd.f32 %v1060, %v1061
        %v1063 = vsel %vm409, %v1027, 0.0
        %v1064 = vadd.f32 %v1062, %v1063
        %v1065 = vsel %vm409, %v1028, 0.0
        %v1066 = vadd.f32 %v1064, %v1065
        %v1067 = vsel %vm409, %v1029, 0.0
        %v1068 = vadd.f32 %v1066, %v1067
        %v1069 = vsel %vm409, %v1030, 0.0
        %v1070 = vadd.f32 %v1068, %v1069
        %v1071 = vsel %vm409, %v1031, 0.0
        %v1072 = vadd.f32 %v1070, %v1071
        %v1073 = vsel %vm409, %v1032, 0.0
        %v1074 = vadd.f32 %v1072, %v1073
        %v1075 = vsel %vm409, %v1033, 0.0
        %v1076 = vadd.f32 %v1074, %v1075
        %v1077 = vsel %vm409, %v1034, 0.0
        %v1078 = vadd.f32 %v1076, %v1077
        %v1079 = vsel %vm409, %v1035, 0.0
        %v1080 = vadd.f32 %v1078, %v1079
        %v1081 = vsel %vm409, %v1036, 0.0
        %v1082 = vadd.f32 %v1080, %v1081
        %v1083 = vsel %vm409, %v1037, 0.0
        %v1084 = vadd.f32 %v1082, %v1083
        %v1085 = vsel %vm409, %v1038, 0.0
        %v1086 = vadd.f32 %v1084, %v1085
        %v1087 = vrot.slane %v1086, 4
        %v1088 = vadd.f32 %v1086, %v1087
        %v1089 = vrot.slane %v1088, 2
        %v1090 = vadd.f32 %v1088, %v1089
        %v1091 = vrot.slane %v1090, 1
        %v1092 = vadd.f32 %v1090, %v1091
        %v1093 = vadd.f32 %v1055, %v1092
        %vm1094 = vcmask 24576
        %1095 = vst.msk [vmem:[#allocation5] sm:$0x1] %vm1094, %v1093
        %s1096 = smul.u32 16, %s20
        %p1097 = scmp.lt.s32.totalorder %s1096, 31
        %s1098 = scalar_select %p1097, %s1096, 31
        %s1099 = smul.addr %s1098, 8
        %s1100 = scalar_lea.vmem %s3, %s1099
        // Predicated region
        $region41: #{tpu_custom_call.1} parent=31 // pred_check
          %p1101 = pneg %p106
        $region42: #{tpu_custom_call.1} parent=31 // pred_check_branch
          %1103 = sbr.rel (%p1101) target = $region44
        $region43: #{tpu_custom_call.1} parent=31 // pred_region
          %s1104 = smul.u32 16, %s20
        $region44: #{tpu_custom_call.1} parent=31 // pred_fallthru
          _
        // Predicated region
        $region45: #{tpu_custom_call.1} parent=31 // pred_check
          %p1105 = pneg %p127
        $region46: #{tpu_custom_call.1} parent=31 // pred_check_branch
          %1107 = sbr.rel (%p1105) target = $region48
        $region47: #{tpu_custom_call.1} parent=31 // pred_region
          %s1109 = ssub.s32 16, 16
          %1110 = vsyncadd [#allocation4], %s1109
          %s1112 = sshll.u32 [#allocation5], 4
          %s1113 = int_to_ptr.vmem [resolvable:$true] %s1112
          %1115 = dma.vmem_to_hbm [thread:$0]  %s1113, 16, %s4, [#allocation4]
        $region48: #{tpu_custom_call.1} parent=31 // pred_fallthru
          _
        // Predicated region
        $region49: #{tpu_custom_call.1} parent=31 // pred_check
          %p1116 = pneg %p127
        $region50: #{tpu_custom_call.1} parent=31 // pred_check_branch
          %1118 = sbr.rel (%p1116) target = $region52
        $region51: #{tpu_custom_call.1} parent=31 // pred_region
          %1119 = dma.done [#allocation4], 16
        $region52: #{tpu_custom_call.1} parent=31 // pred_fallthru
          _
      $region32: #{tpu_custom_call.1} parent=5 // pred_fallthru
        _
      %p1120 = scmp.le.s32.totalorder 2, %s15
      // Predicated region
      $region53: #{tpu_custom_call.1} parent=5 // pred_check
        %p1121 = pneg %p1120
      $region54: #{tpu_custom_call.1} parent=5 // pred_check_branch
        %1123 = sbr.rel (%p1121) target = $region56
      $region55: #{tpu_custom_call.1} parent=5 // pred_region
        %s1124 = ssub.s32 %s15, 2
        // Predicated region
        $region57: #{tpu_custom_call.1} parent=55 // pred_check
          %p1125 = pneg %p112
        $region58: #{tpu_custom_call.1} parent=55 // pred_check_branch
          %1127 = sbr.rel (%p1125) target = $region60
        $region59: #{tpu_custom_call.1} parent=55 // pred_region
          %s1128 = smul.u32 16, %s21
          %p1129 = scmp.lt.s32.totalorder %s1128, 31
          %s1130 = scalar_select %p1129, %s1128, 31
          %s1131 = smul.addr %s1130, 8
          %s1132 = scalar_lea.vmem %s3, %s1131
        $region60: #{tpu_custom_call.1} parent=55 // pred_fallthru
          _
      $region56: #{tpu_custom_call.1} parent=5 // pred_fallthru
        _
    $region6: #{tpu_custom_call.1} parent=1 // loop_footer
      %s19 = sadd.s32 1, %s15
    $region7: #{tpu_custom_call.1} parent=1 // loop_footer_branch
      %14 = sbr.rel target = $region3
    $region8: #{tpu_custom_call.1} parent=1 // loop_exit
      _
    %1133 = vsyncpa [#allocation3], 1
    %s1134 = scalar_lea.sflag [#allocation3], 1
    %1135 = vsyncpa %s1134, 1
    %1136 = vsyncpa [#allocation4], 1
    %s1137 = scalar_lea.sflag [#allocation4], 1
    %1138 = vsyncpa %s1137, 1

</llo_original>
